<compile_context>
chip_gen: v5e
topology: v5e:2x2
jax: 0.10.0
libtpu: 0.0.40
codegen_flags: <defaults>
</compile_context>

<pallas_src>
from functools import partial

import jax
import jax.numpy as jnp
from jax.experimental import pallas as pl
from jax.experimental.pallas import tpu as pltpu


def _round_up(x, m):
    return ((x + m - 1) // m) * m


def _cdiv(a, b):
    return -(-a // b)


def _pad2(a, rows, cols):
    return jnp.pad(a, ((0, rows - a.shape[0]), (0, cols - a.shape[1])))


def _invariant_spec(shape):
    """Grid-invariant block (weights / biases): single pipeline buffer."""
    try:
        return pl.BlockSpec(shape, lambda i: (0, 0), pipeline_mode=pl.Buffered(1))
    except Exception:
        # Fallback for jax versions without pipeline_mode / Buffered.
        return pl.BlockSpec(shape, lambda i: (0, 0))


def _relu_dtype():
    """bf16 ReLU on v6e/v7x (bf16 VPU); f32 on v5e and older (always correct)."""
    try:
        kind = jax.devices()[0].device_kind.lower()
    except Exception:
        return jnp.float32
    for old in ("v2", "v3", "v4", "v5"):
        if old in kind:
            return jnp.float32
    return jnp.bfloat16


def _vmem_capacity_bytes():
    try:
        return int(pltpu.get_tpu_info().vmem_capacity_bytes)
    except Exception:
        return 64 << 20  # conservative: v7x per-TensorCore VMEM


def _mlp_updater_kernel(num_layers, relu_dt, h_ref, x_ref, *refs):
    """refs = (w1h, w1x, b1, w2, b2, ..., wL, bL, out_ref).

    h_ref   : (TM, dim_out)  f32 row tile of H_prev
    x_ref   : (TM, dim_in)   f32 row tile of X
    w/b     : bf16 / f32, grid-invariant (VMEM-resident)
    out_ref : (TM, Dp)
    """
    out_ref = refs[-1]
    params = refs[:-1]
    cdt = params[0].dtype  # MXU compute dtype (bf16)

    # Layer 1: concat folded into two MXU dots, f32 accumulation.
    h = jnp.dot(h_ref[...].astype(cdt), params[0][...],
                preferred_element_type=jnp.float32)
    h = h + jnp.dot(x_ref[...].astype(cdt), params[1][...],
                    preferred_element_type=jnp.float32)
    h = h + params[2][...]

    # Remaining layers: ReLU (bf16 on v6e/v7x, f32 on v5e), then MXU dot.
    for l in range(1, num_layers):
        w = params[1 + 2 * l]
        b = params[2 + 2 * l]
        h = jnp.maximum(h.astype(relu_dt), 0).astype(w.dtype)
        h = jnp.dot(h, w[...], preferred_element_type=jnp.float32) + b[...]

    out_ref[...] = h.astype(out_ref.dtype)


def mlp_updater(h_prev, x, weights, biases, *, tm=512, compute_dtype=jnp.bfloat16):
    """
    h_prev : (N, dim_out)  previous node state
    x      : (N, dim_in)   new node feature
    weights: list of (in_f, out_f) arrays; weights[0] has in_f = dim_out + dim_in
    biases : list of (out_f,) arrays
    returns: (N, dim_out)  new node state
    """
    num_layers = len(weights)
    N, dim_out = h_prev.shape
    _, dim_in = x.shape
    assert weights[0].shape[0] == dim_out + dim_in
    out_dtype = h_prev.dtype
    cdt = compute_dtype
    relu_dt = _relu_dtype()

    Dp = _round_up(dim_out, 128)  # lane-dense hidden / output width

    # Row tile: large enough to amortize the ~0.35 us per-grid-step overhead and
    # feed the 256-wide MXUs with LHS rows, but split so the grid has >= 2
    # steps (both TensorCores on v7x).  TODO(synk): sweep tm in {512, 1024} and
    # input pipeline depth (pl.Buffered(3)) for very large N / tiny MLPs.
    n_rows = _round_up(max(N, 1), 8)
    if n_rows <= 2 * tm:
        TM = max(8, _round_up(_cdiv(n_rows, 2), 8))
    else:
        TM = tm
    grid = (_cdiv(N, TM),)

    # Layer-1 weight split into the [W1h; W1x] halves of torch.cat((H, X), 1).
    # Only output columns are zero-padded: padded lanes get weight 0 + bias 0,
    # ReLU(0)=0, so padding is preserved exactly through every layer.
    w1h = _pad2(weights[0][:dim_out, :], dim_out, Dp).astype(cdt)
    w1x = _pad2(weights[0][dim_out:, :], dim_in, Dp).astype(cdt)
    b1 = _pad2(biases[0].reshape(1, -1), 1, Dp).astype(jnp.float32)

    args = [h_prev, x, w1h, w1x, b1]
    in_specs = [
        pl.BlockSpec((TM, dim_out), lambda i: (i, 0)),  # streamed row tiles
        pl.BlockSpec((TM, dim_in), lambda i: (i, 0)),
        _invariant_spec(w1h.shape),
        _invariant_spec(w1x.shape),
        _invariant_spec(b1.shape),
    ]
    for l in range(1, num_layers):
        w = _pad2(weights[l], Dp, Dp).astype(cdt)
        b = _pad2(biases[l].reshape(1, -1), 1, Dp).astype(jnp.float32)
        args += [w, b]
        in_specs += [_invariant_spec(w.shape), _invariant_spec(b.shape)]

    # VMEM budget: single-buffered resident params + double-buffered row tiles
    # + f32 intermediates, capped below the physical VMEM of this chip.
    bpe = jnp.dtype(cdt).itemsize
    in_bpe = jnp.dtype(h_prev.dtype).itemsize
    out_bpe = jnp.dtype(out_dtype).itemsize
    resident = ((dim_out + dim_in) * Dp + (num_layers - 1) * Dp * Dp) * bpe \
               + num_layers * Dp * 4
    pipelined = 2 * TM * (dim_out + dim_in) * in_bpe + 2 * TM * Dp * out_bpe
    scratch = 4 * TM * Dp * 4
    vmem_cap = int(0.85 * _vmem_capacity_bytes())
    vmem_limit = min(
        max(32 << 20, int(1.3 * (resident + pipelined + scratch)) + (4 << 20)),
        vmem_cap)

    flops = 2 * N * ((dim_out + dim_in) * Dp + (num_layers - 1) * Dp * Dp)
    bytes_accessed = int(N * (dim_out + dim_in) * in_bpe + resident
                         + N * Dp * out_bpe)

    out = pl.pallas_call(
        partial(_mlp_updater_kernel, num_layers, relu_dt),
        out_shape=jax.ShapeDtypeStruct((N, Dp), out_dtype),
        grid=grid,
        in_specs=in_specs,
        out_specs=pl.BlockSpec((TM, Dp), lambda i: (i, 0)),
        compiler_params=pltpu.CompilerParams(
            dimension_semantics=("parallel",),  # row tiles -> both TCs on v7x
            vmem_limit_bytes=vmem_limit,
        ),
        cost_estimate=pl.CostEstimate(
            flops=flops, transcendentals=0, bytes_accessed=bytes_accessed),
    )(*args)

    # Rows never need trimming (partial last row block is clipped by the
    # writeback DMA); slice only the feature dim, and only when needed.
    if dim_out == Dp:
        return out
    return out[:, :dim_out]


def mlp_updater_reference(h_prev, x, weights, biases):
    """Pure-JAX f32 reference of the same forward pass."""
    h = jnp.concatenate([h_prev, x], axis=1)
    num_layers = len(weights)
    for l in range(num_layers):
        h = h @ weights[l] + biases[l]
        if l < num_layers - 1:
            h = jnp.maximum(h, 0.0)
    return h


def _make_case(key, N, dim_in, dim_out, num_layers):
    k_h, k_x, *k_params = jax.random.split(key, 2 + 2 * num_layers)
    h_prev = jax.random.normal(k_h, (N, dim_out), dtype=jnp.float32)
    x = jax.random.normal(k_x, (N, dim_in), dtype=jnp.float32)
    weights, biases = [], []
    in_f = dim_in + dim_out
    for l in range(num_layers):
        out_f = dim_out
        w = 0.1 * jax.random.normal(k_params[2 * l], (in_f, out_f), dtype=jnp.float32)
        b = 0.01 * jax.random.normal(k_params[2 * l + 1], (out_f,), dtype=jnp.float32)
        weights.append(w)
        biases.append(b)
        in_f = out_f
    return h_prev, x, weights, biases


if __name__ == "__main__":
    key = jax.random.PRNGKey(0)
    k1, k2 = jax.random.split(key)

    # Case 1: small shapes matching the module (2-layer MLP, dim_in=32, dim_out=32).
    h_prev, x, weights, biases = _make_case(k1, N=16, dim_in=32, dim_out=32,
                                            num_layers=2)
    h_new = jax.block_until_ready(mlp_updater(h_prev, x, weights, biases))
    ref = mlp_updater_reference(h_prev, x, weights, biases)
    assert h_new.shape == ref.shape
    assert jnp.allclose(h_new, ref, atol=5e-2, rtol=5e-2), "case 1 mismatch"

    # Case 2: ragged N (partial last row block), non-128 dim_out, 3 layers.
    h_prev, x, weights, biases = _make_case(k2, N=300, dim_in=48, dim_out=80,
                                            num_layers=3)
    h_new = jax.block_until_ready(mlp_updater(h_prev, x, weights, biases))
    ref = mlp_updater_reference(h_prev, x, weights, biases)
    assert h_new.shape == ref.shape
    assert jnp.allclose(h_new, ref, atol=5e-2, rtol=5e-2), "case 2 mismatch"

    print("KERNEL_OK")
</pallas_src>

<mosaic_0001>
module attributes {stable_mosaic.version = 11 : i64} {
  func.func @_mlp_updater_kernel(%arg0: i32, %arg1: memref<8x32xf32, #tpu.memory_space<vmem>>, %arg2: memref<8x32xf32, #tpu.memory_space<vmem>>, %arg3: memref<32x128xbf16, #tpu.memory_space<vmem>>, %arg4: memref<32x128xbf16, #tpu.memory_space<vmem>>, %arg5: memref<1x128xf32, #tpu.memory_space<vmem>>, %arg6: memref<128x128xbf16, #tpu.memory_space<vmem>>, %arg7: memref<1x128xf32, #tpu.memory_space<vmem>>, %arg8: memref<8x128xf32, #tpu.memory_space<vmem>>) attributes {dimension_semantics = [#tpu.dimension_semantics<parallel>], iteration_bounds = array<i64: 2>, scalar_prefetch = 0 : i64, scratch_operands = 0 : i64, tpu.core_type = #tpu.core_type<tc>, window_params = [{transform_indices = @transform_0, window_bounds = array<i64: 8, 32>}, {transform_indices = @transform_1, window_bounds = array<i64: 8, 32>}, {pipeline_mode = #tpu.pipeline_mode<synchronous>, transform_indices = @transform_2, window_bounds = array<i64: 32, 128>}, {pipeline_mode = #tpu.pipeline_mode<synchronous>, transform_indices = @transform_3, window_bounds = array<i64: 32, 128>}, {pipeline_mode = #tpu.pipeline_mode<synchronous>, transform_indices = @transform_4, window_bounds = array<i64: 1, 128>}, {pipeline_mode = #tpu.pipeline_mode<synchronous>, transform_indices = @transform_5, window_bounds = array<i64: 128, 128>}, {pipeline_mode = #tpu.pipeline_mode<synchronous>, transform_indices = @transform_6, window_bounds = array<i64: 1, 128>}, {transform_indices = @transform_7, window_bounds = array<i64: 8, 128>}]} {
    %c0 = arith.constant 0 : index
    %c0_0 = arith.constant 0 : index
    %0 = vector.load %arg1[%c0, %c0_0] : memref<8x32xf32, #tpu.memory_space<vmem>>, vector<8x32xf32>
    %1 = arith.truncf %0 : vector<8x32xf32> to vector<8x32xbf16>
    %c0_1 = arith.constant 0 : index
    %c0_2 = arith.constant 0 : index
    %2 = vector.load %arg3[%c0_1, %c0_2] : memref<32x128xbf16, #tpu.memory_space<vmem>>, vector<32x128xbf16>
    %cst = arith.constant dense<0.000000e+00> : vector<8x128xf32>
    %3 = tpu.matmul %1, %2, %cst {dimension_numbers = #tpu.dot_dimension_numbers<[1], [0], [0], [1], [0, 0, 1, 1], [], []>} : vector<8x32xbf16>, vector<32x128xbf16>, vector<8x128xf32> -> vector<8x128xf32>
    %c0_3 = arith.constant 0 : index
    %c0_4 = arith.constant 0 : index
    %4 = vector.load %arg2[%c0_3, %c0_4] : memref<8x32xf32, #tpu.memory_space<vmem>>, vector<8x32xf32>
    %5 = arith.truncf %4 : vector<8x32xf32> to vector<8x32xbf16>
    %c0_5 = arith.constant 0 : index
    %c0_6 = arith.constant 0 : index
    %6 = vector.load %arg4[%c0_5, %c0_6] : memref<32x128xbf16, #tpu.memory_space<vmem>>, vector<32x128xbf16>
    %cst_7 = arith.constant dense<0.000000e+00> : vector<8x128xf32>
    %7 = tpu.matmul %5, %6, %cst_7 {dimension_numbers = #tpu.dot_dimension_numbers<[1], [0], [0], [1], [0, 0, 1, 1], [], []>} : vector<8x32xbf16>, vector<32x128xbf16>, vector<8x128xf32> -> vector<8x128xf32>
    %8 = arith.addf %3, %7 : vector<8x128xf32>
    %c0_8 = arith.constant 0 : index
    %c0_9 = arith.constant 0 : index
    %9 = vector.load %arg5[%c0_8, %c0_9] : memref<1x128xf32, #tpu.memory_space<vmem>>, vector<1x128xf32>
    %10 = vector.broadcast %9 : vector<1x128xf32> to vector<8x128xf32>
    %11 = arith.addf %8, %10 : vector<8x128xf32>
    %12 = arith.truncf %11 : vector<8x128xf32> to vector<8x128xbf16>
    %cst_10 = arith.constant 0.000000e+00 : bf16
    %13 = vector.broadcast %cst_10 : bf16 to vector<8x128xbf16>
    %14 = arith.maximumf %12, %13 : vector<8x128xbf16>
    %c0_11 = arith.constant 0 : index
    %c0_12 = arith.constant 0 : index
    %15 = vector.load %arg6[%c0_11, %c0_12] : memref<128x128xbf16, #tpu.memory_space<vmem>>, vector<128x128xbf16>
    %cst_13 = arith.constant dense<0.000000e+00> : vector<8x128xf32>
    %16 = tpu.matmul %14, %15, %cst_13 {dimension_numbers = #tpu.dot_dimension_numbers<[1], [0], [0], [1], [0, 0, 1, 1], [], []>} : vector<8x128xbf16>, vector<128x128xbf16>, vector<8x128xf32> -> vector<8x128xf32>
    %c0_14 = arith.constant 0 : index
    %c0_15 = arith.constant 0 : index
    %17 = vector.load %arg7[%c0_14, %c0_15] : memref<1x128xf32, #tpu.memory_space<vmem>>, vector<1x128xf32>
    %18 = vector.broadcast %17 : vector<1x128xf32> to vector<8x128xf32>
    %19 = arith.addf %16, %18 : vector<8x128xf32>
    %c0_16 = arith.constant 0 : index
    %c0_17 = arith.constant 0 : index
    %20 = vector.load %arg8[%c0_16, %c0_17] : memref<8x128xf32, #tpu.memory_space<vmem>>, vector<8x128xf32>
    tpu.vector_store %arg8[%c0_16, %c0_17], %19 {strides = array<i32>} : memref<8x128xf32, #tpu.memory_space<vmem>>, vector<8x128xf32>,
    return
  }
  func.func @transform_0(%arg0: i32) -> (i32, i32) {
    %c0_i32 = arith.constant 0 : i32
    %c0_i32_0 = arith.constant 0 : i32
    return %arg0, %c0_i32 : i32, i32
  }
  func.func @transform_1(%arg0: i32) -> (i32, i32) {
    %c0_i32 = arith.constant 0 : i32
    %c0_i32_0 = arith.constant 0 : i32
    return %arg0, %c0_i32 : i32, i32
  }
  func.func @transform_2(%arg0: i32) -> (i32, i32) {
    %c0_i32 = arith.constant 0 : i32
    %c0_i32_0 = arith.constant 0 : i32
    %c0_i32_1 = arith.constant 0 : i32
    return %c0_i32, %c0_i32_0 : i32, i32
  }
  func.func @transform_3(%arg0: i32) -> (i32, i32) {
    %c0_i32 = arith.constant 0 : i32
    %c0_i32_0 = arith.constant 0 : i32
    %c0_i32_1 = arith.constant 0 : i32
    return %c0_i32, %c0_i32_0 : i32, i32
  }
  func.func @transform_4(%arg0: i32) -> (i32, i32) {
    %c0_i32 = arith.constant 0 : i32
    %c0_i32_0 = arith.constant 0 : i32
    %c0_i32_1 = arith.constant 0 : i32
    return %c0_i32, %c0_i32_0 : i32, i32
  }
  func.func @transform_5(%arg0: i32) -> (i32, i32) {
    %c0_i32 = arith.constant 0 : i32
    %c0_i32_0 = arith.constant 0 : i32
    %c0_i32_1 = arith.constant 0 : i32
    return %c0_i32, %c0_i32_0 : i32, i32
  }
  func.func @transform_6(%arg0: i32) -> (i32, i32) {
    %c0_i32 = arith.constant 0 : i32
    %c0_i32_0 = arith.constant 0 : i32
    %c0_i32_1 = arith.constant 0 : i32
    return %c0_i32, %c0_i32_0 : i32, i32
  }
  func.func @transform_7(%arg0: i32) -> (i32, i32) {
    %c0_i32 = arith.constant 0 : i32
    %c0_i32_0 = arith.constant 0 : i32
    return %arg0, %c0_i32 : i32, i32
  }
}

</mosaic_0001>

<llo_original>
// kernel: tpu_custom_call.1
$region0: #{tpu_custom_call.1}
  #allocation0 [shape = 'u32[]', space=smem, size = 0x4, offset = 0x4, fixed_abs, tag = 'smem constant byte address 0x4 - core index']
  #allocation1 [shape = 'u32[72,128]{1,0:T(1,128)}', space=vmem, size = 0x9000, scoped, tag = 'internal scratch']
  %s0 = inlined_call_operand.hbm [shape: f32[16,32], index: 0, kind: input, shape index: {}]
  %s1 = inlined_call_operand.hbm [shape: f32[16,32], index: 1, kind: input, shape index: {}]
  %s2 = inlined_call_operand.hbm [shape: bf16[32,128], index: 2, kind: input, shape index: {}]
  %s3 = inlined_call_operand.hbm [shape: bf16[32,128], index: 3, kind: input, shape index: {}]
  %s4 = inlined_call_operand.vmem [shape: f32[1,128], index: 4, kind: input, shape index: {}]
  %s5 = inlined_call_operand.hbm [shape: bf16[128,128], index: 5, kind: input, shape index: {}]
  %s6 = inlined_call_operand.vmem [shape: f32[1,128], index: 6, kind: input, shape index: {}]
  %s7 = inlined_call_operand.hbm [shape: f32[16,128], index: 7, kind: output, shape index: {}]
  %s8 = sld [smem:[#allocation0]]
  $region81: #{tpu_custom_call.1} parent=0
    _
  %s10 = ssub.s32 1, %s8
  %s11 = scalar_select 0, %s10, %s8
  $region1: #{tpu_custom_call.1} parent=0
    #allocation2 [shape = 'u8[8192]{0}', space=vmem, size = 0x2000, scoped, tag = 'input window, operand 0']
    #allocation3 [shape = 's32[2]{0}', space=sflag, size = 0x8, scoped, tag = 'scoped memory for tpu_custom_call.1']
    #allocation4 [shape = 's32[2]{0}', space=sflag, size = 0x8, scoped, tag = 'scoped memory for tpu_custom_call.1']
    #allocation5 [shape = 'u8[8192]{0}', space=vmem, size = 0x2000, scoped, tag = 'input window, operand 1']
    #allocation6 [shape = 's32[2]{0}', space=sflag, size = 0x8, scoped, tag = 'scoped memory for tpu_custom_call.1']
    #allocation7 [shape = 'u8[8192]{0}', space=vmem, size = 0x2000, scoped, tag = 'input window, operand 2, single buffered']
    #allocation8 [shape = 'u8[8192]{0}', space=vmem, size = 0x2000, scoped, tag = 'input window, operand 3, single buffered']
    #allocation9 [shape = 's32[1]{0}', space=sflag, size = 0x4, scoped, tag = 'scoped memory for tpu_custom_call.1']
    #allocation10 [shape = 'u8[32768]{0}', space=vmem, size = 0x8000, scoped, tag = 'input window, operand 5, single buffered']
    #allocation11 [shape = 'u8[8192]{0}', space=vmem, size = 0x2000, scoped, tag = 'output window, operand 0']
    %12 = vsyncpa [#allocation3], 0
    %s13 = scalar_lea.sflag [#allocation3], 1
    %14 = vsyncpa %s13, 0
    %15 = vsyncpa [#allocation6], 0
    %s16 = scalar_lea.sflag [#allocation6], 1
    %17 = vsyncpa %s16, 0
    %18 = vsyncpa [#allocation9], 0
    %19 = vsyncpa [#allocation4], 0
    %s20 = scalar_lea.sflag [#allocation4], 1
    %21 = vsyncpa %s20, 0
    loop: start=0, step=1, limit=4
    $region2: #{tpu_custom_call.1} parent=1 // loop_pre_header
      _
    $region3: #{tpu_custom_call.1} parent=1 // loop_header
      %s23 = sphi 0, %s27
      %p24 = scmp.ge.s32.totalorder %s23, 4
      %s33 = sphi 0, %s35
      %s36 = sphi 0, %s33
      %s37 = sphi 0, %s36
      %s53 = sphi 0, %s37
      %s59 = sphi 0, %s61
      %s62 = sphi 0, %s59
      %s63 = sphi 0, %s62
      %s79 = sphi 0, %s63
      %s83 = sphi 0, %s83
      %s85 = sphi 0, %s83
      %s86 = sphi 0, %s85
      %s100 = sphi 0, %s86
      %s104 = sphi 0, %s104
      %s106 = sphi 0, %s104
      %s107 = sphi 0, %s106
      %s121 = sphi 0, %s107
      %s125 = sphi 0, %s125
      %s127 = sphi 0, %s125
      %s128 = sphi 0, %s127
      %s142 = sphi 0, %s128
      %s146 = sphi 0, %s146
      %s148 = sphi 0, %s146
      %s149 = sphi 0, %s148
      %s163 = sphi 0, %s149
      %s167 = sphi 0, %s167
      %s169 = sphi 0, %s167
      %s170 = sphi 0, %s169
      %s184 = sphi 0, %s170
      %s190 = sphi 0, %s192
      %s193 = sphi 0, %s190
      %s194 = sphi 0, %s193
      %s210 = sphi 0, %s194
    $region4: #{tpu_custom_call.1} parent=1 // loop_header_branch
      %26 = sbr.rel (%p24) target = $region8
    $region5: #{tpu_custom_call.1} parent=1 // loop_body
      %s28 = ssub.s32 %s23, 1
      %s29 = ssub.s32 %s23, 2
      %s30 = sadd.s32 %s23, 1
      %s31 = ssub.s32 %s23, %s30
      %p32 = scmp.eq.s32.totalorder %s31, 0
      %s34 = sadd.s32 %s33, 1
      %s35 = scalar_select %p32, %s33, %s34
      %p38 = pneg %p32
      %p39 = scmp.eq.s32.totalorder %s23, 1
      %p40 = por %p38, %p39
      %p41 = scmp.ne.s32.totalorder %s33, %s36
      %p42 = scmp.eq.s32.totalorder %s23, 0
      %p43 = por %p41, %p42
      %p44 = scmp.ne.s32.totalorder %s33, %s36
      %p45 = scmp.eq.s32.totalorder %s28, 1
      %p46 = por %p44, %p45
      %p47 = scmp.ne.s32.totalorder %s36, %s37
      %p48 = scmp.eq.s32.totalorder %s28, 0
      %p49 = por %p47, %p48
      %p50 = scmp.ne.s32.totalorder %s36, %s37
      %p51 = scmp.eq.s32.totalorder %s29, 1
      %p52 = por %p50, %p51
      %p54 = scmp.ne.s32.totalorder %s37, %s53
      %p55 = scmp.eq.s32.totalorder %s29, 0
      %p56 = por %p54, %p55
      %s57 = ssub.s32 %s23, %s30
      %p58 = scmp.eq.s32.totalorder %s57, 0
      %s60 = sadd.s32 %s59, 1
      %s61 = scalar_select %p58, %s59, %s60
      %p64 = pneg %p58
      %p65 = scmp.eq.s32.totalorder %s23, 1
      %p66 = por %p64, %p65
      %p67 = scmp.ne.s32.totalorder %s59, %s62
      %p68 = scmp.eq.s32.totalorder %s23, 0
      %p69 = por %p67, %p68
      %p70 = scmp.ne.s32.totalorder %s59, %s62
      %p71 = scmp.eq.s32.totalorder %s28, 1
      %p72 = por %p70, %p71
      %p73 = scmp.ne.s32.totalorder %s62, %s63
      %p74 = scmp.eq.s32.totalorder %s28, 0
      %p75 = por %p73, %p74
      %p76 = scmp.ne.s32.totalorder %s62, %s63
      %p77 = scmp.eq.s32.totalorder %s29, 1
      %p78 = por %p76, %p77
      %p80 = scmp.ne.s32.totalorder %s63, %s79
      %p81 = scmp.eq.s32.totalorder %s29, 0
      %p82 = por %p80, %p81
      %s84 = sadd.s32 %s83, 1
      %p87 = scmp.eq.s32.totalorder %s23, 1
      %p88 = scmp.ne.s32.totalorder %s83, %s85
      %p89 = scmp.eq.s32.totalorder %s23, 0
      %p90 = por %p88, %p89
      %p91 = scmp.ne.s32.totalorder %s83, %s85
      %p92 = scmp.eq.s32.totalorder %s28, 1
      %p93 = por %p91, %p92
      %p94 = scmp.ne.s32.totalorder %s85, %s86
      %p95 = scmp.eq.s32.totalorder %s28, 0
      %p96 = por %p94, %p95
      %p97 = scmp.ne.s32.totalorder %s85, %s86
      %p98 = scmp.eq.s32.totalorder %s29, 1
      %p99 = por %p97, %p98
      %p101 = scmp.ne.s32.totalorder %s86, %s100
      %p102 = scmp.eq.s32.totalorder %s29, 0
      %p103 = por %p101, %p102
      %s105 = sadd.s32 %s104, 1
      %p108 = scmp.eq.s32.totalorder %s23, 1
      %p109 = scmp.ne.s32.totalorder %s104, %s106
      %p110 = scmp.eq.s32.totalorder %s23, 0
      %p111 = por %p109, %p110
      %p112 = scmp.ne.s32.totalorder %s104, %s106
      %p113 = scmp.eq.s32.totalorder %s28, 1
      %p114 = por %p112, %p113
      %p115 = scmp.ne.s32.totalorder %s106, %s107
      %p116 = scmp.eq.s32.totalorder %s28, 0
      %p117 = por %p115, %p116
      %p118 = scmp.ne.s32.totalorder %s106, %s107
      %p119 = scmp.eq.s32.totalorder %s29, 1
      %p120 = por %p118, %p119
      %p122 = scmp.ne.s32.totalorder %s107, %s121
      %p123 = scmp.eq.s32.totalorder %s29, 0
      %p124 = por %p122, %p123
      %s126 = sadd.s32 %s125, 1
      %p129 = scmp.eq.s32.totalorder %s23, 1
      %p130 = scmp.ne.s32.totalorder %s125, %s127
      %p131 = scmp.eq.s32.totalorder %s23, 0
      %p132 = por %p130, %p131
      %p133 = scmp.ne.s32.totalorder %s125, %s127
      %p134 = scmp.eq.s32.totalorder %s28, 1
      %p135 = por %p133, %p134
      %p136 = scmp.ne.s32.totalorder %s127, %s128
      %p137 = scmp.eq.s32.totalorder %s28, 0
      %p138 = por %p136, %p137
      %p139 = scmp.ne.s32.totalorder %s127, %s128
      %p140 = scmp.eq.s32.totalorder %s29, 1
      %p141 = por %p139, %p140
      %p143 = scmp.ne.s32.totalorder %s128, %s142
      %p144 = scmp.eq.s32.totalorder %s29, 0
      %p145 = por %p143, %p144
      %s147 = sadd.s32 %s146, 1
      %p150 = scmp.eq.s32.totalorder %s23, 1
      %p151 = scmp.ne.s32.totalorder %s146, %s148
      %p152 = scmp.eq.s32.totalorder %s23, 0
      %p153 = por %p151, %p152
      %p154 = scmp.ne.s32.totalorder %s146, %s148
      %p155 = scmp.eq.s32.totalorder %s28, 1
      %p156 = por %p154, %p155
      %p157 = scmp.ne.s32.totalorder %s148, %s149
      %p158 = scmp.eq.s32.totalorder %s28, 0
      %p159 = por %p157, %p158
      %p160 = scmp.ne.s32.totalorder %s148, %s149
      %p161 = scmp.eq.s32.totalorder %s29, 1
      %p162 = por %p160, %p161
      %p164 = scmp.ne.s32.totalorder %s149, %s163
      %p165 = scmp.eq.s32.totalorder %s29, 0
      %p166 = por %p164, %p165
      %s168 = sadd.s32 %s167, 1
      %p171 = scmp.eq.s32.totalorder %s23, 1
      %p172 = scmp.ne.s32.totalorder %s167, %s169
      %p173 = scmp.eq.s32.totalorder %s23, 0
      %p174 = por %p172, %p173
      %p175 = scmp.ne.s32.totalorder %s167, %s169
      %p176 = scmp.eq.s32.totalorder %s28, 1
      %p177 = por %p175, %p176
      %p178 = scmp.ne.s32.totalorder %s169, %s170
      %p179 = scmp.eq.s32.totalorder %s28, 0
      %p180 = por %p178, %p179
      %p181 = scmp.ne.s32.totalorder %s169, %s170
      %p182 = scmp.eq.s32.totalorder %s29, 1
      %p183 = por %p181, %p182
      %p185 = scmp.ne.s32.totalorder %s170, %s184
      %p186 = scmp.eq.s32.totalorder %s29, 0
      %p187 = por %p185, %p186
      %s188 = ssub.s32 %s23, %s30
      %p189 = scmp.eq.s32.totalorder %s188, 0
      %s191 = sadd.s32 %s190, 1
      %s192 = scalar_select %p189, %s190, %s191
      %p195 = pneg %p189
      %p196 = scmp.eq.s32.totalorder %s23, 1
      %p197 = por %p195, %p196
      %p198 = scmp.ne.s32.totalorder %s190, %s193
      %p199 = scmp.eq.s32.totalorder %s23, 0
      %p200 = por %p198, %p199
      %p201 = scmp.ne.s32.totalorder %s190, %s193
      %p202 = scmp.eq.s32.totalorder %s28, 1
      %p203 = por %p201, %p202
      %p204 = scmp.ne.s32.totalorder %s193, %s194
      %p205 = scmp.eq.s32.totalorder %s28, 0
      %p206 = por %p204, %p205
      %p207 = scmp.ne.s32.totalorder %s193, %s194
      %p208 = scmp.eq.s32.totalorder %s29, 1
      %p209 = por %p207, %p208
      %p211 = scmp.ne.s32.totalorder %s194, %s210
      %p212 = scmp.eq.s32.totalorder %s29, 0
      %p213 = por %p211, %p212
      %p214 = scmp.le.s32.totalorder 1, %s23
      %p215 = scmp.lt.s32.totalorder %s23, 3
      %p216 = pnand %p214, %p215
      %p217 = pneg %p216
      // Predicated region
      $region9: #{tpu_custom_call.1} parent=5 // pred_check
        _
      $region10: #{tpu_custom_call.1} parent=5 // pred_check_branch
        %219 = sbr.rel (%p216) target = $region12
      $region11: #{tpu_custom_call.1} parent=5 // pred_region
        %s220 = ssub.s32 %s23, 1
        // Predicated region
        $region13: #{tpu_custom_call.1} parent=11 // pred_check
          %p221 = pneg %p96
        $region14: #{tpu_custom_call.1} parent=11 // pred_check_branch
          %223 = sbr.rel (%p221) target = $region16
        $region15: #{tpu_custom_call.1} parent=11 // pred_region
          %225 = vsyncadd [#allocation6], 0
          %s226 = sshll.u32 %s2, 4
          %s227 = int_to_ptr.hbm [resolvable:$true] %s226
          %s228 = sshll.u32 [#allocation7], 4
          %s229 = int_to_ptr.vmem [resolvable:$true] %s228
          %234 = dma.hbm_to_vmem [thread:$0]  %s227, 256, %s229, [#allocation6], 64, 64, 4
        $region16: #{tpu_custom_call.1} parent=11 // pred_fallthru
          _
        // Predicated region
        $region17: #{tpu_custom_call.1} parent=11 // pred_check
          %p235 = pneg %p117
        $region18: #{tpu_custom_call.1} parent=11 // pred_check_branch
          %237 = sbr.rel (%p235) target = $region20
        $region19: #{tpu_custom_call.1} parent=11 // pred_region
          %239 = vsyncadd [#allocation9], 0
          %s240 = sshll.u32 %s3, 4
          %s241 = int_to_ptr.hbm [resolvable:$true] %s240
          %s242 = sshll.u32 [#allocation8], 4
          %s243 = int_to_ptr.vmem [resolvable:$true] %s242
          %248 = dma.hbm_to_vmem [thread:$0]  %s241, 256, %s243, [#allocation9], 64, 64, 4
        $region20: #{tpu_custom_call.1} parent=11 // pred_fallthru
          _
        // Predicated region
        $region21: #{tpu_custom_call.1} parent=11 // pred_check
          %p249 = pneg %p138
        $region22: #{tpu_custom_call.1} parent=11 // pred_check_branch
          %251 = sbr.rel (%p249) target = $region24
        $region23: #{tpu_custom_call.1} parent=11 // pred_region
          _
        $region24: #{tpu_custom_call.1} parent=11 // pred_fallthru
          _
        // Predicated region
        $region25: #{tpu_custom_call.1} parent=11 // pred_check
          %p252 = pneg %p159
        $region26: #{tpu_custom_call.1} parent=11 // pred_check_branch
          %254 = sbr.rel (%p252) target = $region28
        $region27: #{tpu_custom_call.1} parent=11 // pred_region
          %256 = vsyncadd [#allocation9], 0
          %s257 = sshll.u32 %s5, 4
          %s258 = int_to_ptr.hbm [resolvable:$true] %s257
          %s259 = sshll.u32 [#allocation10], 4
          %s260 = int_to_ptr.vmem [resolvable:$true] %s259
          %265 = dma.hbm_to_vmem [thread:$0]  %s258, 1024, %s260, [#allocation9], 64, 64, 4
        $region28: #{tpu_custom_call.1} parent=11 // pred_fallthru
          _
        // Predicated region
        $region29: #{tpu_custom_call.1} parent=11 // pred_check
          %p266 = pneg %p180
        $region30: #{tpu_custom_call.1} parent=11 // pred_check_branch
          %268 = sbr.rel (%p266) target = $region32
        $region31: #{tpu_custom_call.1} parent=11 // pred_region
          _
        $region32: #{tpu_custom_call.1} parent=11 // pred_fallthru
          _
      $region12: #{tpu_custom_call.1} parent=5 // pred_fallthru
        _
      %p269 = scmp.lt.s32.totalorder %s23, 2
      // Predicated region
      $region33: #{tpu_custom_call.1} parent=5 // pred_check
        %p270 = pneg %p269
      $region34: #{tpu_custom_call.1} parent=5 // pred_check_branch
        %272 = sbr.rel (%p270) target = $region36
      $region35: #{tpu_custom_call.1} parent=5 // pred_region
        // Predicated region
        $region37: #{tpu_custom_call.1} parent=35 // pred_check
          %p273 = pneg %p43
        $region38: #{tpu_custom_call.1} parent=35 // pred_check_branch
          %275 = sbr.rel (%p273) target = $region40
        $region39: #{tpu_custom_call.1} parent=35 // pred_region
          %s276 = sand.u32 %s33, 1
          %s277 = scalar_lea.sflag [#allocation3], %s276
          %s278 = sand.u32 %s33, 1
          %s279 = smul.addr %s278, 8
          %s280 = scalar_lea.vmem [#allocation2], %s279
          %282 = vsyncadd %s277, 0
          %s283 = smul.addr %s23, 8
          %s284 = scalar_lea.hbm %s0, %s283
          %s286 = sshll.u32 %s284, 4
          %s287 = int_to_ptr.hbm [resolvable:$true] %s286
          %s288 = sshll.u32 %s280, 4
          %s289 = int_to_ptr.vmem [resolvable:$true] %s288
          %291 = dma.hbm_to_vmem [thread:$0]  %s287, 128, %s289, %s277
        $region40: #{tpu_custom_call.1} parent=35 // pred_fallthru
          _
        // Predicated region
        $region41: #{tpu_custom_call.1} parent=35 // pred_check
          %p292 = pneg %p69
        $region42: #{tpu_custom_call.1} parent=35 // pred_check_branch
          %294 = sbr.rel (%p292) target = $region44
        $region43: #{tpu_custom_call.1} parent=35 // pred_region
          %s295 = sand.u32 %s23, 1
          %s296 = scalar_lea.sflag [#allocation6], %s295
          %s297 = sand.u32 %s59, 1
          %s298 = smul.addr %s297, 8
          %s299 = scalar_lea.vmem [#allocation5], %s298
          %301 = vsyncadd %s296, 0
          %s302 = smul.addr %s23, 8
          %s303 = scalar_lea.hbm %s1, %s302
          %s305 = sshll.u32 %s303, 4
          %s306 = int_to_ptr.hbm [resolvable:$true] %s305
          %s307 = sshll.u32 %s299, 4
          %s308 = int_to_ptr.vmem [resolvable:$true] %s307
          %310 = dma.hbm_to_vmem [thread:$0]  %s306, 128, %s308, %s296
        $region44: #{tpu_custom_call.1} parent=35 // pred_fallthru
          _
      $region36: #{tpu_custom_call.1} parent=5 // pred_fallthru
        _
      %p311 = scmp.le.s32.totalorder 1, %s23
      %p312 = scmp.lt.s32.totalorder %s23, 3
      %p313 = pnand %p311, %p312
      %p314 = pneg %p313
      // Predicated region
      $region45: #{tpu_custom_call.1} parent=5 // pred_check
        _
      $region46: #{tpu_custom_call.1} parent=5 // pred_check_branch
        %316 = sbr.rel (%p313) target = $region48
      $region47: #{tpu_custom_call.1} parent=5 // pred_region
        %s317 = ssub.s32 %s23, 1
        %s318 = sand.u32 %s36, 1
        %s319 = scalar_lea.sflag [#allocation3], %s318
        %s320 = sand.u32 %s36, 1
        %s321 = smul.addr %s320, 8
        %s322 = scalar_lea.vmem [#allocation2], %s321
        // Predicated region
        $region49: #{tpu_custom_call.1} parent=47 // pred_check
          %p323 = pneg %p49
        $region50: #{tpu_custom_call.1} parent=47 // pred_check_branch
          %325 = sbr.rel (%p323) target = $region52
        $region51: #{tpu_custom_call.1} parent=47 // pred_region
          %327 = dma.done %s319, 128
        $region52: #{tpu_custom_call.1} parent=47 // pred_fallthru
          _
        %s328 = sand.u32 %s28, 1
        %s329 = scalar_lea.sflag [#allocation6], %s328
        %s330 = sand.u32 %s62, 1
        %s331 = smul.addr %s330, 8
        %s332 = scalar_lea.vmem [#allocation5], %s331
        // Predicated region
        $region53: #{tpu_custom_call.1} parent=47 // pred_check
          %p333 = pneg %p75
        $region54: #{tpu_custom_call.1} parent=47 // pred_check_branch
          %335 = sbr.rel (%p333) target = $region56
        $region55: #{tpu_custom_call.1} parent=47 // pred_region
          %337 = dma.done %s329, 128
        $region56: #{tpu_custom_call.1} parent=47 // pred_fallthru
          _
        // Predicated region
        $region57: #{tpu_custom_call.1} parent=47 // pred_check
          %p338 = pneg %p96
        $region58: #{tpu_custom_call.1} parent=47 // pred_check_branch
          %340 = sbr.rel (%p338) target = $region60
        $region59: #{tpu_custom_call.1} parent=47 // pred_region
          %342 = dma.done [#allocation6], 256
        $region60: #{tpu_custom_call.1} parent=47 // pred_fallthru
          _
        // Predicated region
        $region61: #{tpu_custom_call.1} parent=47 // pred_check
          %p343 = pneg %p117
        $region62: #{tpu_custom_call.1} parent=47 // pred_check_branch
          %345 = sbr.rel (%p343) target = $region64
        $region63: #{tpu_custom_call.1} parent=47 // pred_region
          %347 = dma.done [#allocation9], 256
        $region64: #{tpu_custom_call.1} parent=47 // pred_fallthru
          _
        // Predicated region
        $region65: #{tpu_custom_call.1} parent=47 // pred_check
          %p348 = pneg %p159
        $region66: #{tpu_custom_call.1} parent=47 // pred_check_branch
          %350 = sbr.rel (%p348) target = $region68
        $region67: #{tpu_custom_call.1} parent=47 // pred_region
          %352 = dma.done [#allocation9], 1024
        $region68: #{tpu_custom_call.1} parent=47 // pred_fallthru
          _
        %s353 = sand.u32 %s36, 1
        %s354 = scalar_lea.sflag [#allocation3], %s353
        %s355 = sand.u32 %s36, 1
        %s356 = smul.addr %s355, 8
        %s357 = scalar_lea.vmem [#allocation2], %s356
        %p358 = pneg %p49
        %p359 = pneg %p46
        %s360 = sand.u32 %s28, 1
        %s361 = scalar_lea.sflag [#allocation6], %s360
        %s362 = sand.u32 %s62, 1
        %s363 = smul.addr %s362, 8
        %s364 = scalar_lea.vmem [#allocation5], %s363
        %p365 = pneg %p75
        %p366 = pneg %p72
        %p367 = pneg %p96
        %p368 = pneg %p93
        %p369 = pneg %p117
        %p370 = pneg %p114
        %p371 = pneg %p138
        %p372 = pneg %p135
        %p373 = pneg %p159
        %p374 = pneg %p156
        %p375 = pneg %p180
        %p376 = pneg %p177
        %p377 = pneg %p206
        %p378 = pneg %p203
        %s379 = sand.u32 %s193, 1
        %s380 = scalar_lea.sflag [#allocation4], %s379
        %s381 = sand.u32 %s193, 1
        %s382 = smul.addr %s381, 8
        %s383 = scalar_lea.vmem [#allocation11], %s382
        %v385 = vld [vmem:[%s322] sm:$0xff]
        %v386 = vpack.c.bf16 %v385, %v385
        %v387 = vld [vmem:[#allocation7] sm:$0xf]
        %v388 = vld [vmem:[#allocation7 + $0x4] sm:$0xf]
        %v389 = vld [vmem:[#allocation7 + $0x8] sm:$0xf]
        %v390 = vld [vmem:[#allocation7 + $0xc] sm:$0xf]
        %v391 = vld [vmem:[%s332] sm:$0xff]
        %v392 = vpack.c.bf16 %v391, %v391
        %v393 = vld [vmem:[#allocation8] sm:$0xf]
        %v394 = vld [vmem:[#allocation8 + $0x4] sm:$0xf]
        %v395 = vld [vmem:[#allocation8 + $0x8] sm:$0xf]
        %v396 = vld [vmem:[#allocation8 + $0xc] sm:$0xf]
        %v401 = vunpack.c.l.b16 %v393
        %v402 = vunpack.c.l.b16 %v394
        %v403 = vunpack.c.l.b16 %v395
        %v404 = vunpack.c.l.b16 %v396
        %v405 = vpack.c.b16 %v402, %v401
        %v406 = vpack.c.b16 %v404, %v403
        %vm409 = vcmask 261120
        %v411 = vsel %vm409, %v392, 0
        %413 = vmatpush.bf16.msra.mxu0 0
        %414 = vmatpush.bf16.msra.mxu0 0
        %415 = vmatpush.bf16.msra.mxu0 0
        %416 = vmatpush.bf16.msra.mxu0 0
        %417 = vmatpush.bf16.msra.mxu0 0
        %418 = vmatpush.bf16.msra.mxu0 0
        %419 = vmatpush.bf16.msra.mxu0 %v406
        %420 = vmatpush.bf16.msra.mxu0 %v405
        %421 = vmatmul.bf16.gmra.mxu0 %v411
        %v422 = vpop.f32.mrf.mxu0
        %v423 = vadd.f32 0.0, %v422
        %v424 = vpop.f32.mrf.mxu0
        %425 = vdwg.mxu0
        %v430 = vunpack.c.l.b16 %v387
        %v431 = vunpack.c.l.b16 %v388
        %v432 = vunpack.c.l.b16 %v389
        %v433 = vunpack.c.l.b16 %v390
        %v434 = vpack.c.b16 %v431, %v430
        %v435 = vpack.c.b16 %v433, %v432
        %v439 = vsel %vm409, %v386, 0
        %441 = vmatpush.bf16.msra.mxu0 0
        %442 = vmatpush.bf16.msra.mxu0 0
        %443 = vmatpush.bf16.msra.mxu0 0
        %444 = vmatpush.bf16.msra.mxu0 0
        %445 = vmatpush.bf16.msra.mxu0 0
        %446 = vmatpush.bf16.msra.mxu0 0
        %447 = vmatpush.bf16.msra.mxu0 %v435
        %448 = vmatpush.bf16.msra.mxu0 %v434
        %449 = vmatmul.bf16.gmra.mxu0 %v439
        %v450 = vpop.f32.mrf.mxu0
        %v451 = vadd.f32 %v423, %v450
        %v452 = vpop.f32.mrf.mxu0
        %453 = vdwg.mxu0
        %v454 = vld [vmem:[%s4] sm:$0x1]
        %v456 = vperm.slane %v454, 0
        %v458 = vadd.f32 %v451, %v456
        %v459 = vpack.c.bf16 %v458, %v458
        %v460 = vunpack.c.l.bf16 %v459
        %v461 = vmax.f32 %v460, 0.0
        %v462 = vpack.c.bf16 %v461, %v461
        %v463 = vld [vmem:[#allocation10] sm:$0xf]
        %v464 = vld [vmem:[#allocation10 + $0x4] sm:$0xf]
        %v465 = vld [vmem:[#allocation10 + $0x8] sm:$0xf]
        %v466 = vld [vmem:[#allocation10 + $0xc] sm:$0xf]
        %v467 = vld [vmem:[#allocation10 + $0x10] sm:$0xf]
        %v468 = vld [vmem:[#allocation10 + $0x14] sm:$0xf]
        %v469 = vld [vmem:[#allocation10 + $0x18] sm:$0xf]
        %v470 = vld [vmem:[#allocation10 + $0x1c] sm:$0xf]
        %v471 = vld [vmem:[#allocation10 + $0x20] sm:$0xf]
        %v472 = vld [vmem:[#allocation10 + $0x24] sm:$0xf]
        %v473 = vld [vmem:[#allocation10 + $0x28] sm:$0xf]
        %v474 = vld [vmem:[#allocation10 + $0x2c] sm:$0xf]
        %v475 = vld [vmem:[#allocation10 + $0x30] sm:$0xf]
        %v476 = vld [vmem:[#allocation10 + $0x34] sm:$0xf]
        %v477 = vld [vmem:[#allocation10 + $0x38] sm:$0xf]
        %v478 = vld [vmem:[#allocation10 + $0x3c] sm:$0xf]
        %v479 = vld [vmem:[%s6] sm:$0x1]
        %v481 = vperm.slane %v479, 0
        %v499 = vunpack.c.l.b16 %v463
        %v500 = vunpack.c.l.b16 %v464
        %v501 = vunpack.c.l.b16 %v465
        %v502 = vunpack.c.l.b16 %v466
        %v503 = vunpack.c.l.b16 %v467
        %v504 = vunpack.c.l.b16 %v468
        %v505 = vunpack.c.l.b16 %v469
        %v506 = vunpack.c.l.b16 %v470
        %v507 = vunpack.c.l.b16 %v471
        %v508 = vunpack.c.l.b16 %v472
        %v509 = vunpack.c.l.b16 %v473
        %v510 = vunpack.c.l.b16 %v474
        %v511 = vunpack.c.l.b16 %v475
        %v512 = vunpack.c.l.b16 %v476
        %v513 = vunpack.c.l.b16 %v477
        %v514 = vunpack.c.l.b16 %v478
        %v515 = vpack.c.b16 %v500, %v499
        %v516 = vpack.c.b16 %v502, %v501
        %v517 = vpack.c.b16 %v504, %v503
        %v518 = vpack.c.b16 %v506, %v505
        %v519 = vpack.c.b16 %v508, %v507
        %v520 = vpack.c.b16 %v510, %v509
        %v521 = vpack.c.b16 %v512, %v511
        %v522 = vpack.c.b16 %v514, %v513
        %531 = vmatpush.bf16.msra.mxu0 %v522
        %532 = vmatpush.bf16.msra.mxu0 %v521
        %533 = vmatpush.bf16.msra.mxu0 %v520
        %534 = vmatpush.bf16.msra.mxu0 %v519
        %535 = vmatpush.bf16.msra.mxu0 %v518
        %536 = vmatpush.bf16.msra.mxu0 %v517
        %537 = vmatpush.bf16.msra.mxu0 %v516
        %538 = vmatpush.bf16.msra.mxu0 %v515
        %539 = vmatmul.bf16.gmra.mxu0 %v462
        %v540 = vpop.f32.mrf.mxu0
        %v541 = vadd.f32 %v481, %v540
        %v542 = vpop.f32.mrf.mxu0
        %543 = vdwg.mxu0
        %544 = vst [vmem:[%s383] sm:$0xff] %v541
        %s545 = sand.u32 %s193, 1
        %s546 = scalar_lea.sflag [#allocation4], %s545
        %s547 = sand.u32 %s193, 1
        %s548 = smul.addr %s547, 8
        %s549 = scalar_lea.vmem [#allocation11], %s548
        // Predicated region
        $region69: #{tpu_custom_call.1} parent=47 // pred_check
          %p550 = pneg %p203
        $region70: #{tpu_custom_call.1} parent=47 // pred_check_branch
          %552 = sbr.rel (%p550) target = $region72
        $region71: #{tpu_custom_call.1} parent=47 // pred_region
          %554 = vsyncadd %s546, 0
          %s555 = smul.addr %s28, 8
          %s556 = scalar_lea.hbm %s7, %s555
          %s558 = sshll.u32 %s549, 4
          %s559 = int_to_ptr.vmem [resolvable:$true] %s558
          %s560 = sshll.u32 %s556, 4
          %s561 = int_to_ptr.hbm [resolvable:$true] %s560
          %563 = dma.vmem_to_hbm [thread:$0]  %s559, 128, %s561, %s546
        $region72: #{tpu_custom_call.1} parent=47 // pred_fallthru
          _
      $region48: #{tpu_custom_call.1} parent=5 // pred_fallthru
        _
      %p564 = scmp.le.s32.totalorder 2, %s23
      // Predicated region
      $region73: #{tpu_custom_call.1} parent=5 // pred_check
        %p565 = pneg %p564
      $region74: #{tpu_custom_call.1} parent=5 // pred_check_branch
        %567 = sbr.rel (%p565) target = $region76
      $region75: #{tpu_custom_call.1} parent=5 // pred_region
        %s568 = ssub.s32 %s23, 2
        // Predicated region
        $region77: #{tpu_custom_call.1} parent=75 // pred_check
          %p569 = pneg %p209
        $region78: #{tpu_custom_call.1} parent=75 // pred_check_branch
          %571 = sbr.rel (%p569) target = $region80
        $region79: #{tpu_custom_call.1} parent=75 // pred_region
          %s572 = sand.u32 %s194, 1
          %s573 = scalar_lea.sflag [#allocation4], %s572
          %s574 = sand.u32 %s194, 1
          %s575 = smul.addr %s574, 8
          %s576 = scalar_lea.vmem [#allocation11], %s575
          %578 = dma.done %s573, 128
        $region80: #{tpu_custom_call.1} parent=75 // pred_fallthru
          _
      $region76: #{tpu_custom_call.1} parent=5 // pred_fallthru
        _
    $region6: #{tpu_custom_call.1} parent=1 // loop_footer
      %s27 = sadd.s32 1, %s23
    $region7: #{tpu_custom_call.1} parent=1 // loop_footer_branch
      %22 = sbr.rel target = $region3
    $region8: #{tpu_custom_call.1} parent=1 // loop_exit
      _
    %579 = vsyncpa [#allocation3], 1
    %s580 = scalar_lea.sflag [#allocation3], 1
    %581 = vsyncpa %s580, 1
    %582 = vsyncpa [#allocation6], 1
    %s583 = scalar_lea.sflag [#allocation6], 1
    %584 = vsyncpa %s583, 1
    %585 = vsyncpa [#allocation9], 1
    %586 = vsyncpa [#allocation4], 1
    %s587 = scalar_lea.sflag [#allocation4], 1
    %588 = vsyncpa %s587, 1

</llo_original>
